<compile_context>
chip_gen: v7x
topology: tpu7x:2x2x1
jax: 0.10.0
libtpu: 0.0.40
codegen_flags: <defaults>
</compile_context>

<pallas_src>
import functools

import jax
import jax.numpy as jnp
from jax.experimental import pallas as pl
from jax.experimental.pallas import tpu as pltpu


def _lstm_step_kernel(x_ref, w_ih_ref, w_hh_ref, o_ref, h_scr, c_scr,
                      *, hidden: int, subsample: bool):
    """One LSTM time step; grid axis 0 walks the (sequential) time dimension."""
    t = pl.program_id(0)

    @pl.when(t == 0)
    def _init():
        h_scr[...] = jnp.zeros_like(h_scr)
        c_scr[...] = jnp.zeros_like(c_scr)

    x_t = x_ref[0].astype(jnp.float32)        # (B, F)
    h_prev = h_scr[...]                       # (B, H)
    c_prev = c_scr[...]                       # (B, H)

    # Gates in PyTorch LSTM order: i, f, g, o.  Weights are pre-transposed in
    # the wrapper so both matmuls are plain (B, K) @ (K, 4H) MXU calls with a
    # lane-dense 4H output.
    gates = (
        jnp.dot(x_t, w_ih_ref[...].astype(jnp.float32),
                preferred_element_type=jnp.float32)
        + jnp.dot(h_prev, w_hh_ref[...].astype(jnp.float32),
                  preferred_element_type=jnp.float32)
    )                                         # (B, 4H)

    i_g = jax.nn.sigmoid(gates[:, 0 * hidden:1 * hidden])
    f_g = jax.nn.sigmoid(gates[:, 1 * hidden:2 * hidden])
    g_g = jnp.tanh(gates[:, 2 * hidden:3 * hidden])
    o_g = jax.nn.sigmoid(gates[:, 3 * hidden:4 * hidden])

    c_new = f_g * c_prev + i_g * g_g
    h_new = o_g * jnp.tanh(c_new)

    c_scr[...] = c_new
    h_scr[...] = h_new

    if subsample:
        # Fused x[::2]: only even steps write their output block.  Odd-step
        # hidden states are never materialized to HBM (no strided copy pass,
        # no XLU sublane gather, and HBM write traffic is halved).
        @pl.when(t % 2 == 0)
        def _write():
            o_ref[0] = h_new.astype(o_ref.dtype)
    else:
        o_ref[0] = h_new.astype(o_ref.dtype)


def batch_rnn_forward(x, w_ih, w_hh, *, subsample=False, lengths=None):
    """Pallas implementation of BatchRNN.forward (default config).

    x:    (T, B, F)   time-major, as in the PyTorch module
    w_ih: (4H, F)     PyTorch LSTM weight_ih_l0 (bias=False)
    w_hh: (4H, H)     PyTorch LSTM weight_hh_l0
    """
    T, B, F = x.shape
    four_h, _ = w_ih.shape
    H = four_h // 4

    # Pre-transpose once in the wrapper so the kernel body is two clean
    # (B,K)@(K,4H) matmuls (lane-dense output, no per-step transpose).
    w_ih_t = jnp.transpose(w_ih)              # (F, 4H)
    w_hh_t = jnp.transpose(w_hh)              # (H, 4H)

    t_out = (T + 1) // 2 if subsample else T
    out_index_map = (lambda t: (t // 2, 0, 0)) if subsample else (lambda t: (t, 0, 0))

    itemsize = jnp.dtype(x.dtype).itemsize
    cost = pl.CostEstimate(
        flops=2 * T * B * 4 * H * (F + H),
        transcendentals=5 * T * B * H,
        bytes_accessed=(T * B * F + 4 * H * (F + H) + t_out * B * H) * itemsize,
    )

    out = pl.pallas_call(
        functools.partial(_lstm_step_kernel, hidden=H, subsample=subsample),
        out_shape=jax.ShapeDtypeStruct((t_out, B, H), x.dtype),
        grid=(T,),
        in_specs=[
            # Per-step input slab (auto-pipelined: step t+1 prefetched while
            # step t computes).
            pl.BlockSpec((1, B, F), lambda t: (t, 0, 0)),
            # Weights: full arrays, constant index_map -> resident in VMEM.
            pl.BlockSpec((F, 4 * H), lambda t: (0, 0)),
            pl.BlockSpec((H, 4 * H), lambda t: (0, 0)),
        ],
        out_specs=pl.BlockSpec((1, B, H), out_index_map),
        scratch_shapes=[
            pltpu.VMEM((B, H), jnp.float32),  # h carry
            pltpu.VMEM((B, H), jnp.float32),  # c carry
        ],
        compiler_params=pltpu.CompilerParams(
            # Time axis is a true recurrence -> must stay sequential.
            dimension_semantics=("arbitrary",),
        ),
        cost_estimate=cost,
    )(x, w_ih_t, w_hh_t)

    if lengths is not None:
        out_lens = (lengths + 1) // 2 if subsample else lengths
        return out, out_lens
    return out


def _lstm_ref(x, w_ih, w_hh):
    """Pure-JAX reference matching torch.nn.LSTM(bias=False) forward."""
    T, B, _ = x.shape
    H = w_hh.shape[1]
    h = jnp.zeros((B, H), jnp.float32)
    c = jnp.zeros((B, H), jnp.float32)
    outs = []
    for t in range(T):
        gates = x[t] @ w_ih.T + h @ w_hh.T
        i = jax.nn.sigmoid(gates[:, 0 * H:1 * H])
        f = jax.nn.sigmoid(gates[:, 1 * H:2 * H])
        g = jnp.tanh(gates[:, 2 * H:3 * H])
        o = jax.nn.sigmoid(gates[:, 3 * H:4 * H])
        c = f * c + i * g
        h = o * jnp.tanh(c)
        outs.append(h)
    return jnp.stack(outs).astype(x.dtype)


if __name__ == "__main__":
    key = jax.random.PRNGKey(0)
    T, B, F, H = 8, 2, 32, 32

    k1, k2, k3 = jax.random.split(key, 3)
    x = jax.random.normal(k1, (T, B, F), dtype=jnp.float32)
    w_ih = jax.random.normal(k2, (4 * H, F), dtype=jnp.float32) * (1.0 / F ** 0.5)
    w_hh = jax.random.normal(k3, (4 * H, H), dtype=jnp.float32) * (1.0 / H ** 0.5)
    lengths = jnp.array([T, T - 2], dtype=jnp.int32)

    # Default config: Identity norm, LSTM, no projection / residual / subsample.
    out = jax.block_until_ready(batch_rnn_forward(x, w_ih, w_hh))
    ref = _lstm_ref(x, w_ih, w_hh)
    assert out.shape == (T, B, H), out.shape
    assert jnp.allclose(out, ref, rtol=1e-3, atol=1e-3), "LSTM output mismatch"

    # subsample=True path: x[::2], lengths -> (lengths + 1) // 2.
    out_sub, lens_sub = jax.block_until_ready(
        batch_rnn_forward(x, w_ih, w_hh, subsample=True, lengths=lengths)
    )
    assert out_sub.shape == ((T + 1) // 2, B, H), out_sub.shape
    assert jnp.allclose(out_sub, ref[::2], rtol=1e-3, atol=1e-3), "subsample mismatch"
    assert jnp.array_equal(lens_sub, (lengths + 1) // 2), "lens mismatch"

    print("KERNEL_OK")
</pallas_src>

<mosaic_0001>
module attributes {stable_mosaic.version = 11 : i64} {
  func.func @_lstm_step_kernel(%arg0: i32, %arg1: memref<1x2x32xf32, #tpu.memory_space<vmem>>, %arg2: memref<32x128xf32, #tpu.memory_space<vmem>>, %arg3: memref<32x128xf32, #tpu.memory_space<vmem>>, %arg4: memref<1x2x32xf32, #tpu.memory_space<vmem>>, %arg5: memref<2x32xf32, #tpu.memory_space<vmem>>, %arg6: memref<2x32xf32, #tpu.memory_space<vmem>>) attributes {dimension_semantics = [#tpu.dimension_semantics<arbitrary>], iteration_bounds = array<i64: 8>, scalar_prefetch = 0 : i64, scratch_operands = 2 : i64, tpu.core_type = #tpu.core_type<tc>, window_params = [{transform_indices = @transform_0, window_bounds = array<i64: 1, 2, 32>}, {pipeline_mode = #tpu.pipeline_mode<synchronous>, transform_indices = @transform_1, window_bounds = array<i64: 32, 128>}, {pipeline_mode = #tpu.pipeline_mode<synchronous>, transform_indices = @transform_2, window_bounds = array<i64: 32, 128>}, {transform_indices = @transform_3, window_bounds = array<i64: 1, 2, 32>}]} {
    %c0_i32 = arith.constant 0 : i32
    %0 = arith.cmpi eq, %arg0, %c0_i32 : i32
    %1 = arith.extui %0 : i1 to i32
    %c0_i32_0 = arith.constant 0 : i32
    %2 = arith.cmpi ne, %1, %c0_i32_0 : i32
    scf.if %2 {
      %cst_22 = arith.constant 0.000000e+00 : f32
      %42 = vector.broadcast %cst_22 : f32 to vector<2x32xf32>
      %c0_23 = arith.constant 0 : index
      %c0_24 = arith.constant 0 : index
      %43 = vector.load %arg5[%c0_23, %c0_24] : memref<2x32xf32, #tpu.memory_space<vmem>>, vector<2x32xf32>
      tpu.vector_store %arg5[%c0_23, %c0_24], %42 {strides = array<i32>} : memref<2x32xf32, #tpu.memory_space<vmem>>, vector<2x32xf32>,
      %cst_25 = arith.constant 0.000000e+00 : f32
      %44 = vector.broadcast %cst_25 : f32 to vector<2x32xf32>
      %c0_26 = arith.constant 0 : index
      %c0_27 = arith.constant 0 : index
      %45 = vector.load %arg6[%c0_26, %c0_27] : memref<2x32xf32, #tpu.memory_space<vmem>>, vector<2x32xf32>
      tpu.vector_store %arg6[%c0_26, %c0_27], %44 {strides = array<i32>} : memref<2x32xf32, #tpu.memory_space<vmem>>, vector<2x32xf32>,
    } else {
    }
    %c0 = arith.constant 0 : index
    %c0_1 = arith.constant 0 : index
    %c0_2 = arith.constant 0 : index
    %3 = vector.load %arg1[%c0, %c0_1, %c0_2] : memref<1x2x32xf32, #tpu.memory_space<vmem>>, vector<1x2x32xf32>
    %4 = vector.shape_cast %3 : vector<1x2x32xf32> to vector<2x32xf32>
    %c0_3 = arith.constant 0 : index
    %c0_4 = arith.constant 0 : index
    %5 = vector.load %arg5[%c0_3, %c0_4] : memref<2x32xf32, #tpu.memory_space<vmem>>, vector<2x32xf32>
    %c0_5 = arith.constant 0 : index
    %c0_6 = arith.constant 0 : index
    %6 = vector.load %arg6[%c0_5, %c0_6] : memref<2x32xf32, #tpu.memory_space<vmem>>, vector<2x32xf32>
    %c0_7 = arith.constant 0 : index
    %c0_8 = arith.constant 0 : index
    %7 = vector.load %arg2[%c0_7, %c0_8] : memref<32x128xf32, #tpu.memory_space<vmem>>, vector<32x128xf32>
    %cst = arith.constant dense<0.000000e+00> : vector<2x128xf32>
    %8 = tpu.matmul %4, %7, %cst {dimension_numbers = #tpu.dot_dimension_numbers<[1], [0], [0], [1], [0, 0, 1, 1], [], []>} : vector<2x32xf32>, vector<32x128xf32>, vector<2x128xf32> -> vector<2x128xf32>
    %c0_9 = arith.constant 0 : index
    %c0_10 = arith.constant 0 : index
    %9 = vector.load %arg3[%c0_9, %c0_10] : memref<32x128xf32, #tpu.memory_space<vmem>>, vector<32x128xf32>
    %cst_11 = arith.constant dense<0.000000e+00> : vector<2x128xf32>
    %10 = tpu.matmul %5, %9, %cst_11 {dimension_numbers = #tpu.dot_dimension_numbers<[1], [0], [0], [1], [0, 0, 1, 1], [], []>} : vector<2x32xf32>, vector<32x128xf32>, vector<2x128xf32> -> vector<2x128xf32>
    %11 = arith.addf %8, %10 : vector<2x128xf32>
    %12 = vector.extract_strided_slice %11 {offsets = [0, 0], sizes = [2, 32], strides = [1, 1]} : vector<2x128xf32> to vector<2x32xf32>
    %13 = arith.negf %12 : vector<2x32xf32>
    %14 = math.exp %13 : vector<2x32xf32>
    %cst_12 = arith.constant 1.000000e+00 : f32
    %15 = vector.broadcast %cst_12 : f32 to vector<2x32xf32>
    %16 = arith.addf %15, %14 : vector<2x32xf32>
    %17 = arith.divf %15, %16 : vector<2x32xf32>
    %18 = vector.extract_strided_slice %11 {offsets = [0, 32], sizes = [2, 32], strides = [1, 1]} : vector<2x128xf32> to vector<2x32xf32>
    %19 = arith.negf %18 : vector<2x32xf32>
    %20 = math.exp %19 : vector<2x32xf32>
    %cst_13 = arith.constant 1.000000e+00 : f32
    %21 = vector.broadcast %cst_13 : f32 to vector<2x32xf32>
    %22 = arith.addf %21, %20 : vector<2x32xf32>
    %23 = arith.divf %21, %22 : vector<2x32xf32>
    %24 = vector.extract_strided_slice %11 {offsets = [0, 64], sizes = [2, 32], strides = [1, 1]} : vector<2x128xf32> to vector<2x32xf32>
    %25 = math.tanh %24 : vector<2x32xf32>
    %26 = vector.extract_strided_slice %11 {offsets = [0, 96], sizes = [2, 32], strides = [1, 1]} : vector<2x128xf32> to vector<2x32xf32>
    %27 = arith.negf %26 : vector<2x32xf32>
    %28 = math.exp %27 : vector<2x32xf32>
    %cst_14 = arith.constant 1.000000e+00 : f32
    %29 = vector.broadcast %cst_14 : f32 to vector<2x32xf32>
    %30 = arith.addf %29, %28 : vector<2x32xf32>
    %31 = arith.divf %29, %30 : vector<2x32xf32>
    %32 = arith.mulf %23, %6 : vector<2x32xf32>
    %33 = arith.mulf %17, %25 : vector<2x32xf32>
    %34 = arith.addf %32, %33 : vector<2x32xf32>
    %35 = math.tanh %34 : vector<2x32xf32>
    %36 = arith.mulf %31, %35 : vector<2x32xf32>
    %c0_15 = arith.constant 0 : index
    %c0_16 = arith.constant 0 : index
    %37 = vector.load %arg6[%c0_15, %c0_16] : memref<2x32xf32, #tpu.memory_space<vmem>>, vector<2x32xf32>
    tpu.vector_store %arg6[%c0_15, %c0_16], %34 {strides = array<i32>} : memref<2x32xf32, #tpu.memory_space<vmem>>, vector<2x32xf32>,
    %c0_17 = arith.constant 0 : index
    %c0_18 = arith.constant 0 : index
    %38 = vector.load %arg5[%c0_17, %c0_18] : memref<2x32xf32, #tpu.memory_space<vmem>>, vector<2x32xf32>
    tpu.vector_store %arg5[%c0_17, %c0_18], %36 {strides = array<i32>} : memref<2x32xf32, #tpu.memory_space<vmem>>, vector<2x32xf32>,
    %c0_19 = arith.constant 0 : index
    %c0_20 = arith.constant 0 : index
    %c0_21 = arith.constant 0 : index
    %39 = vector.load %arg4[%c0_19, %c0_20, %c0_21] : memref<1x2x32xf32, #tpu.memory_space<vmem>>, vector<1x2x32xf32>
    %40 = vector.shape_cast %39 : vector<1x2x32xf32> to vector<2x32xf32>
    %41 = vector.shape_cast %36 : vector<2x32xf32> to vector<1x2x32xf32>
    tpu.vector_store %arg4[%c0_19, %c0_20, %c0_21], %41 {strides = array<i32>} : memref<1x2x32xf32, #tpu.memory_space<vmem>>, vector<1x2x32xf32>,
    return
  }
  func.func @transform_0(%arg0: i32) -> (i32, i32, i32) {
    %c0_i32 = arith.constant 0 : i32
    %c0_i32_0 = arith.constant 0 : i32
    %c0_i32_1 = arith.constant 0 : i32
    return %arg0, %c0_i32, %c0_i32_0 : i32, i32, i32
  }
  func.func @transform_1(%arg0: i32) -> (i32, i32) {
    %c0_i32 = arith.constant 0 : i32
    %c0_i32_0 = arith.constant 0 : i32
    %c0_i32_1 = arith.constant 0 : i32
    return %c0_i32, %c0_i32_0 : i32, i32
  }
  func.func @transform_2(%arg0: i32) -> (i32, i32) {
    %c0_i32 = arith.constant 0 : i32
    %c0_i32_0 = arith.constant 0 : i32
    %c0_i32_1 = arith.constant 0 : i32
    return %c0_i32, %c0_i32_0 : i32, i32
  }
  func.func @transform_3(%arg0: i32) -> (i32, i32, i32) {
    %c0_i32 = arith.constant 0 : i32
    %c0_i32_0 = arith.constant 0 : i32
    %c0_i32_1 = arith.constant 0 : i32
    return %arg0, %c0_i32, %c0_i32_0 : i32, i32, i32
  }
}

</mosaic_0001>

<llo_original>
// kernel: tpu_custom_call.1
$region0: #{tpu_custom_call.1}
  #allocation0 [shape = 'u32[]', space=smem, size = 0x4, offset = 0x4, fixed_abs, tag = 'smem constant byte address 0x4 - core index']
  #allocation1 [shape = 'u32[144,128]{1,0:T(1,128)}', space=vmem, size = 0x12000, scoped, tag = 'internal scratch']
  #allocation2 [shape = 'f32[2,32]{1,0:T(2,128)}', space=vmem, size = 0x400, scoped, tag = 'scratch operand']
  #allocation3 [shape = 'f32[2,32]{1,0:T(2,128)}', space=vmem, size = 0x400, scoped, tag = 'scratch operand']
  %s0 = inlined_call_operand.hbm [shape: f32[8,2,32], index: 0, kind: input, shape index: {}]
  %s1 = inlined_call_operand.hbm [shape: f32[32,128], index: 1, kind: input, shape index: {}]
  %s2 = inlined_call_operand.hbm [shape: f32[32,128], index: 2, kind: input, shape index: {}]
  %s3 = inlined_call_operand.hbm [shape: f32[8,2,32], index: 3, kind: output, shape index: {}]
  %s4 = sld [smem:[#allocation0]]
  $region61: #{tpu_custom_call.1} parent=0
    _
  %s6 = ssub.s32 1, %s4
  %s7 = scalar_select 0, %s6, %s4
  $region1: #{tpu_custom_call.1} parent=0
    #allocation4 [shape = 'u8[2048]{0}', space=vmem, size = 0x800, scoped, tag = 'input window, operand 0']
    #allocation5 [shape = 's32[2]{0}', space=sflag, size = 0x8, scoped, tag = 'scoped memory for tpu_custom_call.1']
    #allocation6 [shape = 's32[2]{0}', space=sflag, size = 0x8, scoped, tag = 'scoped memory for tpu_custom_call.1']
    #allocation7 [shape = 'u8[16384]{0}', space=vmem, size = 0x4000, scoped, tag = 'input window, operand 1, single buffered']
    #allocation8 [shape = 's32[1]{0}', space=sflag, size = 0x4, scoped, tag = 'scoped memory for tpu_custom_call.1']
    #allocation9 [shape = 'u8[16384]{0}', space=vmem, size = 0x4000, scoped, tag = 'input window, operand 2, single buffered']
    #allocation10 [shape = 'u8[2048]{0}', space=vmem, size = 0x800, scoped, tag = 'output window, operand 0']
    %8 = vsyncpa [#allocation5], 0
    %s9 = scalar_lea.sflag [#allocation5], 1
    %10 = vsyncpa %s9, 0
    %11 = vsyncpa [#allocation8], 0
    %12 = vsyncpa [#allocation6], 0
    %s13 = scalar_lea.sflag [#allocation6], 1
    %14 = vsyncpa %s13, 0
    loop: start=0, step=1, limit=10
    $region2: #{tpu_custom_call.1} parent=1 // loop_pre_header
      _
    $region3: #{tpu_custom_call.1} parent=1 // loop_header
      %s16 = sphi 0, %s20
      %p17 = scmp.ge.s32.totalorder %s16, 10
      %s26 = sphi 0, %s28
      %s29 = sphi 0, %s26
      %s30 = sphi 0, %s29
      %s46 = sphi 0, %s30
      %s50 = sphi 0, %s50
      %s52 = sphi 0, %s50
      %s53 = sphi 0, %s52
      %s67 = sphi 0, %s53
      %s71 = sphi 0, %s71
      %s73 = sphi 0, %s71
      %s74 = sphi 0, %s73
      %s88 = sphi 0, %s74
      %s94 = sphi 0, %s96
      %s97 = sphi 0, %s94
      %s98 = sphi 0, %s97
      %s114 = sphi 0, %s98
    $region4: #{tpu_custom_call.1} parent=1 // loop_header_branch
      %19 = sbr.rel (%p17) target = $region8
    $region5: #{tpu_custom_call.1} parent=1 // loop_body
      %s21 = ssub.s32 %s16, 1
      %s22 = ssub.s32 %s16, 2
      %s23 = sadd.s32 %s16, 1
      %s24 = ssub.s32 %s16, %s23
      %p25 = scmp.eq.s32.totalorder %s24, 0
      %s27 = sadd.s32 %s26, 1
      %s28 = scalar_select %p25, %s26, %s27
      %p31 = pneg %p25
      %p32 = scmp.eq.s32.totalorder %s16, 7
      %p33 = por %p31, %p32
      %p34 = scmp.ne.s32.totalorder %s26, %s29
      %p35 = scmp.eq.s32.totalorder %s16, 0
      %p36 = por %p34, %p35
      %p37 = scmp.ne.s32.totalorder %s26, %s29
      %p38 = scmp.eq.s32.totalorder %s21, 7
      %p39 = por %p37, %p38
      %p40 = scmp.ne.s32.totalorder %s29, %s30
      %p41 = scmp.eq.s32.totalorder %s21, 0
      %p42 = por %p40, %p41
      %p43 = scmp.ne.s32.totalorder %s29, %s30
      %p44 = scmp.eq.s32.totalorder %s22, 7
      %p45 = por %p43, %p44
      %p47 = scmp.ne.s32.totalorder %s30, %s46
      %p48 = scmp.eq.s32.totalorder %s22, 0
      %p49 = por %p47, %p48
      %s51 = sadd.s32 %s50, 1
      %p54 = scmp.eq.s32.totalorder %s16, 7
      %p55 = scmp.ne.s32.totalorder %s50, %s52
      %p56 = scmp.eq.s32.totalorder %s16, 0
      %p57 = por %p55, %p56
      %p58 = scmp.ne.s32.totalorder %s50, %s52
      %p59 = scmp.eq.s32.totalorder %s21, 7
      %p60 = por %p58, %p59
      %p61 = scmp.ne.s32.totalorder %s52, %s53
      %p62 = scmp.eq.s32.totalorder %s21, 0
      %p63 = por %p61, %p62
      %p64 = scmp.ne.s32.totalorder %s52, %s53
      %p65 = scmp.eq.s32.totalorder %s22, 7
      %p66 = por %p64, %p65
      %p68 = scmp.ne.s32.totalorder %s53, %s67
      %p69 = scmp.eq.s32.totalorder %s22, 0
      %p70 = por %p68, %p69
      %s72 = sadd.s32 %s71, 1
      %p75 = scmp.eq.s32.totalorder %s16, 7
      %p76 = scmp.ne.s32.totalorder %s71, %s73
      %p77 = scmp.eq.s32.totalorder %s16, 0
      %p78 = por %p76, %p77
      %p79 = scmp.ne.s32.totalorder %s71, %s73
      %p80 = scmp.eq.s32.totalorder %s21, 7
      %p81 = por %p79, %p80
      %p82 = scmp.ne.s32.totalorder %s73, %s74
      %p83 = scmp.eq.s32.totalorder %s21, 0
      %p84 = por %p82, %p83
      %p85 = scmp.ne.s32.totalorder %s73, %s74
      %p86 = scmp.eq.s32.totalorder %s22, 7
      %p87 = por %p85, %p86
      %p89 = scmp.ne.s32.totalorder %s74, %s88
      %p90 = scmp.eq.s32.totalorder %s22, 0
      %p91 = por %p89, %p90
      %s92 = ssub.s32 %s16, %s23
      %p93 = scmp.eq.s32.totalorder %s92, 0
      %s95 = sadd.s32 %s94, 1
      %s96 = scalar_select %p93, %s94, %s95
      %p99 = pneg %p93
      %p100 = scmp.eq.s32.totalorder %s16, 7
      %p101 = por %p99, %p100
      %p102 = scmp.ne.s32.totalorder %s94, %s97
      %p103 = scmp.eq.s32.totalorder %s16, 0
      %p104 = por %p102, %p103
      %p105 = scmp.ne.s32.totalorder %s94, %s97
      %p106 = scmp.eq.s32.totalorder %s21, 7
      %p107 = por %p105, %p106
      %p108 = scmp.ne.s32.totalorder %s97, %s98
      %p109 = scmp.eq.s32.totalorder %s21, 0
      %p110 = por %p108, %p109
      %p111 = scmp.ne.s32.totalorder %s97, %s98
      %p112 = scmp.eq.s32.totalorder %s22, 7
      %p113 = por %p111, %p112
      %p115 = scmp.ne.s32.totalorder %s98, %s114
      %p116 = scmp.eq.s32.totalorder %s22, 0
      %p117 = por %p115, %p116
      %p118 = scmp.le.s32.totalorder 1, %s16
      %p119 = scmp.lt.s32.totalorder %s16, 9
      %p120 = pnand %p118, %p119
      %p121 = pneg %p120
      // Predicated region
      $region9: #{tpu_custom_call.1} parent=5 // pred_check
        _
      $region10: #{tpu_custom_call.1} parent=5 // pred_check_branch
        %123 = sbr.rel (%p120) target = $region12
      $region11: #{tpu_custom_call.1} parent=5 // pred_region
        %s124 = ssub.s32 %s16, 1
        // Predicated region
        $region13: #{tpu_custom_call.1} parent=11 // pred_check
          %p125 = pneg %p63
        $region14: #{tpu_custom_call.1} parent=11 // pred_check_branch
          %127 = sbr.rel (%p125) target = $region16
        $region15: #{tpu_custom_call.1} parent=11 // pred_region
          %s129 = ssub.s32 512, 512
          %130 = vsyncadd [#allocation8], %s129
          %s131 = sshll.u32 [#allocation7], 4
          %s132 = int_to_ptr.vmem [resolvable:$true] %s131
          %137 = dma.hbm_to_vmem [thread:$0]  %s1, 512, %s132, [#allocation8], 128, 128, 8
        $region16: #{tpu_custom_call.1} parent=11 // pred_fallthru
          _
        // Predicated region
        $region17: #{tpu_custom_call.1} parent=11 // pred_check
          %p138 = pneg %p84
        $region18: #{tpu_custom_call.1} parent=11 // pred_check_branch
          %140 = sbr.rel (%p138) target = $region20
        $region19: #{tpu_custom_call.1} parent=11 // pred_region
          %s142 = ssub.s32 512, 512
          %143 = vsyncadd [#allocation8], %s142
          %s144 = sshll.u32 [#allocation9], 4
          %s145 = int_to_ptr.vmem [resolvable:$true] %s144
          %150 = dma.hbm_to_vmem [thread:$0]  %s2, 512, %s145, [#allocation8], 128, 128, 8
        $region20: #{tpu_custom_call.1} parent=11 // pred_fallthru
          _
      $region12: #{tpu_custom_call.1} parent=5 // pred_fallthru
        _
      %p151 = scmp.lt.s32.totalorder %s16, 8
      // Predicated region
      $region21: #{tpu_custom_call.1} parent=5 // pred_check
        %p152 = pneg %p151
      $region22: #{tpu_custom_call.1} parent=5 // pred_check_branch
        %154 = sbr.rel (%p152) target = $region24
      $region23: #{tpu_custom_call.1} parent=5 // pred_region
        // Predicated region
        $region25: #{tpu_custom_call.1} parent=23 // pred_check
          %p155 = pneg %p36
        $region26: #{tpu_custom_call.1} parent=23 // pred_check_branch
          %157 = sbr.rel (%p155) target = $region28
        $region27: #{tpu_custom_call.1} parent=23 // pred_region
          %s158 = sand.u32 %s26, 1
          %s159 = scalar_lea.sflag [#allocation5], %s158
          %s160 = sand.u32 %s26, 1
          %s161 = smul.addr %s160, 2
          %s162 = scalar_lea.vmem [#allocation4], %s161
          %s164 = ssub.s32 32, 32
          %165 = vsyncadd %s159, %s164
          %s166 = smul.addr %s16, 32
          %s167 = scalar_lea.hbm %s0, %s166
          %s169 = sshll.u32 %s162, 4
          %s170 = int_to_ptr.vmem [resolvable:$true] %s169
          %172 = dma.hbm_to_vmem [thread:$0]  %s167, 32, %s170, %s159
        $region28: #{tpu_custom_call.1} parent=23 // pred_fallthru
          _
      $region24: #{tpu_custom_call.1} parent=5 // pred_fallthru
        _
      %p173 = scmp.le.s32.totalorder 1, %s16
      %p174 = scmp.lt.s32.totalorder %s16, 9
      %p175 = pnand %p173, %p174
      %p176 = pneg %p175
      // Predicated region
      $region29: #{tpu_custom_call.1} parent=5 // pred_check
        _
      $region30: #{tpu_custom_call.1} parent=5 // pred_check_branch
        %178 = sbr.rel (%p175) target = $region32
      $region31: #{tpu_custom_call.1} parent=5 // pred_region
        %s179 = ssub.s32 %s16, 1
        %s180 = sand.u32 %s29, 1
        %s181 = scalar_lea.sflag [#allocation5], %s180
        %s182 = sand.u32 %s29, 1
        %s183 = smul.addr %s182, 2
        %s184 = scalar_lea.vmem [#allocation4], %s183
        // Predicated region
        $region33: #{tpu_custom_call.1} parent=31 // pred_check
          %p185 = pneg %p42
        $region34: #{tpu_custom_call.1} parent=31 // pred_check_branch
          %187 = sbr.rel (%p185) target = $region36
        $region35: #{tpu_custom_call.1} parent=31 // pred_region
          %188 = dma.done %s181, 32
        $region36: #{tpu_custom_call.1} parent=31 // pred_fallthru
          _
        // Predicated region
        $region37: #{tpu_custom_call.1} parent=31 // pred_check
          %p189 = pneg %p63
        $region38: #{tpu_custom_call.1} parent=31 // pred_check_branch
          %191 = sbr.rel (%p189) target = $region40
        $region39: #{tpu_custom_call.1} parent=31 // pred_region
          %192 = dma.done [#allocation8], 512
        $region40: #{tpu_custom_call.1} parent=31 // pred_fallthru
          _
        // Predicated region
        $region41: #{tpu_custom_call.1} parent=31 // pred_check
          %p193 = pneg %p84
        $region42: #{tpu_custom_call.1} parent=31 // pred_check_branch
          %195 = sbr.rel (%p193) target = $region44
        $region43: #{tpu_custom_call.1} parent=31 // pred_region
          %196 = dma.done [#allocation8], 512
        $region44: #{tpu_custom_call.1} parent=31 // pred_fallthru
          _
        %s197 = sand.u32 %s29, 1
        %s198 = scalar_lea.sflag [#allocation5], %s197
        %s199 = sand.u32 %s29, 1
        %s200 = smul.addr %s199, 2
        %s201 = scalar_lea.vmem [#allocation4], %s200
        %p202 = pneg %p42
        %p203 = pneg %p39
        %p204 = pneg %p63
        %p205 = pneg %p60
        %p206 = pneg %p84
        %p207 = pneg %p81
        %p208 = pneg %p110
        %p209 = pneg %p107
        %s210 = sand.u32 %s97, 1
        %s211 = scalar_lea.sflag [#allocation6], %s210
        %s212 = sand.u32 %s97, 1
        %s213 = smul.addr %s212, 2
        %s214 = scalar_lea.vmem [#allocation10], %s213
        %p215 = scmp.eq.s32.totalorder %s21, 0
        // Predicated region
        $region45: #{tpu_custom_call.1} parent=31 // pred_check
          %p216 = pneg %p215
        $region46: #{tpu_custom_call.1} parent=31 // pred_check_branch
          %218 = sbr.rel (%p216) target = $region48
        $region47: #{tpu_custom_call.1} parent=31 // pred_region
          %vm219 = vcmask 254976
          %220 = vst.msk [vmem:[#allocation2] sm:$0x3] %vm219, 0.0
          %221 = vst.msk [vmem:[#allocation3] sm:$0x3] %vm219, 0.0
        $region48: #{tpu_custom_call.1} parent=31 // pred_fallthru
          _
        %v222 = vld [vmem:[%s184] sm:$0x3]
        %v223 = vld [vmem:[#allocation2] sm:$0x3]
        %v224 = vld [vmem:[#allocation3] sm:$0x3]
        %v225 = vld [vmem:[#allocation7] sm:$0xff]
        %v226 = vld [vmem:[#allocation7 + $0x8] sm:$0xff]
        %v227 = vld [vmem:[#allocation7 + $0x10] sm:$0xff]
        %v228 = vld [vmem:[#allocation7 + $0x18] sm:$0xff]
        %v229 = vld [vmem:[#allocation9] sm:$0xff]
        %v230 = vld [vmem:[#allocation9 + $0x8] sm:$0xff]
        %v231 = vld [vmem:[#allocation9 + $0x10] sm:$0xff]
        %v232 = vld [vmem:[#allocation9 + $0x18] sm:$0xff]
        %vm233 = vcmask 261120
        %v235 = vsel %vm233, %v223, 0
        %237 = vmatprep.subr.mxu0 0.0
        %238 = vmatpush1.msra.mxu0 %v229
        %239 = vmatprep.subr.mxu0 0.0
        %240 = vmatpush1.msra.mxu0 %v230
        %241 = vmatprep.subr.mxu0 0.0
        %242 = vmatpush1.msra.mxu0 %v231
        %243 = vmatprep.subr.mxu0 0.0
        %244 = vmatpush1.msra.mxu0 %v232
        %245 = vmatprep.subr.mxu0 0.0
        %246 = vmatpush1.msra.mxu0 0.0
        %247 = vmatprep.subr.mxu0 0.0
        %248 = vmatpush1.msra.mxu0 0.0
        %249 = vmatprep.subr.mxu0 0.0
        %250 = vmatpush1.msra.mxu0 0.0
        %251 = vmatprep.subr.mxu0 0.0
        %252 = vmatpush1.msra.mxu0 0.0
        %253 = vmatprep.subr.mxu0 0.0
        %254 = vmatpush1.msra.mxu0 0.0
        %255 = vmatprep.subr.mxu0 0.0
        %256 = vmatpush1.msra.mxu0 0.0
        %257 = vmatprep.subr.mxu0 0.0
        %258 = vmatpush1.msra.mxu0 0.0
        %259 = vmatprep.subr.mxu0 0.0
        %260 = vmatpush1.msra.mxu0 0.0
        %261 = vmatprep.subr.mxu0 0.0
        %262 = vmatpush1.msra.mxu0 0.0
        %263 = vmatprep.subr.mxu0 0.0
        %264 = vmatpush1.msra.mxu0 0.0
        %265 = vmatprep.subr.mxu0 0.0
        %266 = vmatpush1.msra.mxu0 0.0
        %267 = vmatprep.subr.mxu0 0.0
        %268 = vmatpush1.msra.mxu0 0.0
        %269 = vmatprep.subr.mxu0 0.0
        %270 = vmatpush1.msra.mxu0 0.0
        %271 = vmatprep.subr.mxu0 0.0
        %272 = vmatpush1.msra.mxu0 0.0
        %273 = vmatprep.subr.mxu0 0.0
        %274 = vmatpush1.msra.mxu0 0.0
        %275 = vmatprep.subr.mxu0 0.0
        %276 = vmatpush1.msra.mxu0 0.0
        %277 = vmatprep.subr.mxu0 0.0
        %278 = vmatpush1.msra.mxu0 0.0
        %279 = vmatprep.subr.mxu0 0.0
        %280 = vmatpush1.msra.mxu0 0.0
        %281 = vmatprep.subr.mxu0 0.0
        %282 = vmatpush1.msra.mxu0 0.0
        %283 = vmatprep.subr.mxu0 0.0
        %284 = vmatpush1.msra.mxu0 0.0
        %285 = vmatprep.subr.mxu0 0.0
        %286 = vmatpush1.msra.mxu0 0.0
        %287 = vmatprep.subr.mxu0 0.0
        %288 = vmatpush1.msra.mxu0 0.0
        %289 = vmatprep.subr.mxu0 0.0
        %290 = vmatpush1.msra.mxu0 0.0
        %291 = vmatprep.subr.mxu0 0.0
        %292 = vmatpush1.msra.mxu0 0.0
        %293 = vmatprep.subr.mxu0 0.0
        %294 = vmatpush1.msra.mxu0 0.0
        %295 = vmatprep.subr.mxu0 0.0
        %296 = vmatpush1.msra.mxu0 0.0
        %297 = vmatprep.subr.mxu0 0.0
        %298 = vmatpush1.msra.mxu0 0.0
        %299 = vmatprep.subr.mxu0 0.0
        %300 = vmatpush1.msra.mxu0 0.0
        %301 = vmatprep.mubr.f32.mxu0 0.0
        %302 = vmatmul.mubr.f32.gmra.mrb[0].mxu0 %v235
        %v303 = vpop.f32.mrb[0].mxu0
        %v304 = vadd.f32 0.0, %v303
        %v305 = vpop.f32.mrb[0].mxu0
        %306 = vdwg.mxu0
        %v308 = vsel %vm233, %v222, 0
        %310 = vmatprep.subr.mxu0 0.0
        %311 = vmatpush1.msra.mxu0 %v225
        %312 = vmatprep.subr.mxu0 0.0
        %313 = vmatpush1.msra.mxu0 %v226
        %314 = vmatprep.subr.mxu0 0.0
        %315 = vmatpush1.msra.mxu0 %v227
        %316 = vmatprep.subr.mxu0 0.0
        %317 = vmatpush1.msra.mxu0 %v228
        %318 = vmatprep.subr.mxu0 0.0
        %319 = vmatpush1.msra.mxu0 0.0
        %320 = vmatprep.subr.mxu0 0.0
        %321 = vmatpush1.msra.mxu0 0.0
        %322 = vmatprep.subr.mxu0 0.0
        %323 = vmatpush1.msra.mxu0 0.0
        %324 = vmatprep.subr.mxu0 0.0
        %325 = vmatpush1.msra.mxu0 0.0
        %326 = vmatprep.subr.mxu0 0.0
        %327 = vmatpush1.msra.mxu0 0.0
        %328 = vmatprep.subr.mxu0 0.0
        %329 = vmatpush1.msra.mxu0 0.0
        %330 = vmatprep.subr.mxu0 0.0
        %331 = vmatpush1.msra.mxu0 0.0
        %332 = vmatprep.subr.mxu0 0.0
        %333 = vmatpush1.msra.mxu0 0.0
        %334 = vmatprep.subr.mxu0 0.0
        %335 = vmatpush1.msra.mxu0 0.0
        %336 = vmatprep.subr.mxu0 0.0
        %337 = vmatpush1.msra.mxu0 0.0
        %338 = vmatprep.subr.mxu0 0.0
        %339 = vmatpush1.msra.mxu0 0.0
        %340 = vmatprep.subr.mxu0 0.0
        %341 = vmatpush1.msra.mxu0 0.0
        %342 = vmatprep.subr.mxu0 0.0
        %343 = vmatpush1.msra.mxu0 0.0
        %344 = vmatprep.subr.mxu0 0.0
        %345 = vmatpush1.msra.mxu0 0.0
        %346 = vmatprep.subr.mxu0 0.0
        %347 = vmatpush1.msra.mxu0 0.0
        %348 = vmatprep.subr.mxu0 0.0
        %349 = vmatpush1.msra.mxu0 0.0
        %350 = vmatprep.subr.mxu0 0.0
        %351 = vmatpush1.msra.mxu0 0.0
        %352 = vmatprep.subr.mxu0 0.0
        %353 = vmatpush1.msra.mxu0 0.0
        %354 = vmatprep.subr.mxu0 0.0
        %355 = vmatpush1.msra.mxu0 0.0
        %356 = vmatprep.subr.mxu0 0.0
        %357 = vmatpush1.msra.mxu0 0.0
        %358 = vmatprep.subr.mxu0 0.0
        %359 = vmatpush1.msra.mxu0 0.0
        %360 = vmatprep.subr.mxu0 0.0
        %361 = vmatpush1.msra.mxu0 0.0
        %362 = vmatprep.subr.mxu0 0.0
        %363 = vmatpush1.msra.mxu0 0.0
        %364 = vmatprep.subr.mxu0 0.0
        %365 = vmatpush1.msra.mxu0 0.0
        %366 = vmatprep.subr.mxu0 0.0
        %367 = vmatpush1.msra.mxu0 0.0
        %368 = vmatprep.subr.mxu0 0.0
        %369 = vmatpush1.msra.mxu0 0.0
        %370 = vmatprep.subr.mxu0 0.0
        %371 = vmatpush1.msra.mxu0 0.0
        %372 = vmatprep.subr.mxu0 0.0
        %373 = vmatpush1.msra.mxu0 0.0
        %374 = vmatprep.mubr.f32.mxu0 0.0
        %375 = vmatmul.mubr.f32.gmra.mrb[0].mxu0 %v308
        %v376 = vpop.f32.mrb[0].mxu0
        %v377 = vadd.f32 %v304, %v376
        %v378 = vpop.f32.mrb[0].mxu0
        %379 = vdwg.mxu0
        %v380 = vxor.u32 %v377, 2147483648
        %v381 = vmul.f32 %v380, 1.442695
        %v382 = vpow.pop %v381
        %v383 = vadd.f32 %v382, 1.0
        %v384 = vrcp.pop %v383
        %v385 = vmul.f32 1.0, %v384
        %v386 = vtanh.pop %v377
        %388 = vrot.lane.b32.xlu0 %v224, 32
        %v389 = vpop.permute.xlu0 %388
        %v391 = vmul.f32 %v385, %v389
        %393 = vrot.lane.b32.xlu0 %v386, 64
        %v394 = vpop.permute.xlu0 %393
        %v396 = vmul.f32 %v385, %v394
        %398 = vrot.lane.b32.xlu0 %v396, 32
        %v399 = vpop.permute.xlu0 %398
        %v401 = vadd.f32 %v391, %v399
        %v402 = vtanh.pop %v401
        %404 = vrot.lane.b32.xlu0 %v402, 64
        %v405 = vpop.permute.xlu0 %404
        %v407 = vmul.f32 %v385, %v405
        %409 = vrot.lane.b32.xlu0 %v401, 96
        %v410 = vpop.permute.xlu0 %409
        %vm412 = vcmask 254976
        %413 = vst.msk [vmem:[#allocation3] sm:$0x3] %vm412, %v410
        %415 = vrot.lane.b32.xlu0 %v407, 32
        %v416 = vpop.permute.xlu0 %415
        %418 = vst.msk [vmem:[#allocation2] sm:$0x3] %vm412, %v416
        %419 = vst.msk [vmem:[%s214] sm:$0x3] %vm412, %v416
        %s420 = sand.u32 %s97, 1
        %s421 = scalar_lea.sflag [#allocation6], %s420
        %s422 = sand.u32 %s97, 1
        %s423 = smul.addr %s422, 2
        %s424 = scalar_lea.vmem [#allocation10], %s423
        // Predicated region
        $region49: #{tpu_custom_call.1} parent=31 // pred_check
          %p425 = pneg %p107
        $region50: #{tpu_custom_call.1} parent=31 // pred_check_branch
          %427 = sbr.rel (%p425) target = $region52
        $region51: #{tpu_custom_call.1} parent=31 // pred_region
          %s429 = ssub.s32 32, 32
          %430 = vsyncadd %s421, %s429
          %s431 = smul.addr %s21, 32
          %s432 = scalar_lea.hbm %s3, %s431
          %s434 = sshll.u32 %s424, 4
          %s435 = int_to_ptr.vmem [resolvable:$true] %s434
          %437 = dma.vmem_to_hbm [thread:$0]  %s435, 32, %s432, %s421
        $region52: #{tpu_custom_call.1} parent=31 // pred_fallthru
          _
      $region32: #{tpu_custom_call.1} parent=5 // pred_fallthru
        _
      %p438 = scmp.le.s32.totalorder 2, %s16
      // Predicated region
      $region53: #{tpu_custom_call.1} parent=5 // pred_check
        %p439 = pneg %p438
      $region54: #{tpu_custom_call.1} parent=5 // pred_check_branch
        %441 = sbr.rel (%p439) target = $region56
      $region55: #{tpu_custom_call.1} parent=5 // pred_region
        %s442 = ssub.s32 %s16, 2
        // Predicated region
        $region57: #{tpu_custom_call.1} parent=55 // pred_check
          %p443 = pneg %p113
        $region58: #{tpu_custom_call.1} parent=55 // pred_check_branch
          %445 = sbr.rel (%p443) target = $region60
        $region59: #{tpu_custom_call.1} parent=55 // pred_region
          %s446 = sand.u32 %s98, 1
          %s447 = scalar_lea.sflag [#allocation6], %s446
          %s448 = sand.u32 %s98, 1
          %s449 = smul.addr %s448, 2
          %s450 = scalar_lea.vmem [#allocation10], %s449
          %451 = dma.done %s447, 32
        $region60: #{tpu_custom_call.1} parent=55 // pred_fallthru
          _
      $region56: #{tpu_custom_call.1} parent=5 // pred_fallthru
        _
    $region6: #{tpu_custom_call.1} parent=1 // loop_footer
      %s20 = sadd.s32 1, %s16
    $region7: #{tpu_custom_call.1} parent=1 // loop_footer_branch
      %15 = sbr.rel target = $region3
    $region8: #{tpu_custom_call.1} parent=1 // loop_exit
      _
    %452 = vsyncpa [#allocation5], 1
    %s453 = scalar_lea.sflag [#allocation5], 1
    %454 = vsyncpa %s453, 1
    %455 = vsyncpa [#allocation8], 1
    %456 = vsyncpa [#allocation6], 1
    %s457 = scalar_lea.sflag [#allocation6], 1
    %458 = vsyncpa %s457, 1

</llo_original>
